<compile_context>
chip_gen: v7x
topology: tpu7x:2x2x1
jax: 0.10.0
libtpu: 0.0.40
codegen_flags: <defaults>
</compile_context>

<pallas_src>
import jax
import jax.numpy as jnp
from jax.experimental import pallas as pl
from jax.experimental.pallas import tpu as pltpu


_TARGET_STEP_BYTES = 4 << 20   # target in+out HBM traffic per grid step
_MAX_NB = 16                   # bound on the unrolled per-batch matmul loop in the kernel
_BUF_FACTOR = 4                # double-buffered input + double-buffered output tiles in VMEM


def _cdiv(a, b):
    return -(-a // b)


def _round_up(x, m):
    return ((x + m - 1) // m) * m


def _vmem_budget_bytes():
    """Per-generation vmem_limit cap: ~36 MiB on v7x (64 MiB/TC), ~80 MiB on v5e/v6e (128 MiB)."""
    try:
        phys = int(pltpu.get_tpu_info().vmem_capacity_bytes)
    except Exception:
        phys = 64 << 20          # conservative default (v7x-sized) if query is unavailable
    return (36 << 20) if phys <= (64 << 20) else (80 << 20)


def _pick_tiles(N, C, HW, itemsize, vmem_budget):
    """Pick (nb, tl) so each grid step carries ~_TARGET_STEP_BYTES of in+out DMA."""
    cpad = _round_up(C, 8)                        # f32 sublane padding in VMEM
    lane_bytes = 2 * cpad * itemsize              # in+out bytes per lane column, per batch elem
    budget = (vmem_budget * 3) // 4               # headroom for Mosaic internal scratch

    # Lane tile: multiple of 256 big enough to hit the byte target with nb=1, capped by the
    # VMEM budget.  tl == HW (whole spatial slab) is always a legal block shape.
    want_tl = _round_up(max(_TARGET_STEP_BYTES // lane_bytes, 256), 256)
    max_tl = max(256, ((budget // (_BUF_FACTOR * cpad * itemsize)) // 256) * 256)
    tl = min(want_tl, max_tl)
    if tl >= HW:
        tl = HW

    # Batch blocking: if one batch element's whole spatial slab is still too small, block NB
    # batch elements per step (multiplies per-step DMA with no extra total HBM traffic).
    nb = 1
    if tl == HW and lane_bytes * tl < _TARGET_STEP_BYTES and N > 1:
        nb = min(N, max(1, _TARGET_STEP_BYTES // (lane_bytes * tl)))
        nb = min(nb, max(1, budget // (_BUF_FACTOR * cpad * tl * itemsize)))
        nb = min(nb, _MAX_NB)

    # Keep a few parallel grid steps so ("parallel","parallel") can shard across TensorCores
    # (v7x megacore); only triggers when total work is small anyway.
    while nb > 1 and _cdiv(N, nb) * _cdiv(HW, tl) < 4:
        nb = max(1, nb // 2)

    return nb, tl, cpad


def _conv1x1_kernel(w_ref, x_ref, o_ref):
    # w_ref: (C, C)       weight, resident across the whole grid
    # x_ref: (NB, C, TL)  lane-dense tiles of NB batch elements' (C, H*W) slabs
    # o_ref: (NB, C, TL)  output tiles, same layout
    w = w_ref[...]
    for b in range(x_ref.shape[0]):   # NB is small & static; each matmul/store stays lane-dense
        o_ref[b] = jnp.dot(w, x_ref[b], preferred_element_type=jnp.float32).astype(o_ref.dtype)


@jax.jit
def invertable_1x1_conv_forward(x, log_det_jac, z, weight):
    """x: (N, C, H, W), log_det_jac: (N,), z: passthrough, weight: (C, C)."""
    N, C, H, W = x.shape
    HW = H * W
    itemsize = x.dtype.itemsize

    vmem_budget = _vmem_budget_bytes()
    nb, tl, cpad = _pick_tiles(N, C, HW, itemsize, vmem_budget)

    # Free contiguous view: NCHW -> (N, C, H*W).  No transpose traffic.
    x3 = x.reshape(N, C, HW)

    # VMEM limit from the PADDED footprint of the chosen tiles (never asks for less than the
    # tiles need; per-generation cap applied via vmem_budget).
    tile_vmem = nb * cpad * _round_up(tl, 128) * itemsize
    w_vmem = cpad * _round_up(C, 128) * itemsize
    vmem_limit = min(max(_BUF_FACTOR * tile_vmem + w_vmem + (2 << 20), 16 << 20), vmem_budget)

    grid = (_cdiv(N, nb), _cdiv(HW, tl))

    y3 = pl.pallas_call(
        _conv1x1_kernel,
        out_shape=jax.ShapeDtypeStruct((N, C, HW), x.dtype),
        grid_spec=pltpu.PrefetchScalarGridSpec(
            num_scalar_prefetch=0,
            grid=grid,
            in_specs=[
                pl.BlockSpec((C, C), lambda n, t: (0, 0)),          # resident weight
                pl.BlockSpec((nb, C, tl), lambda n, t: (n, 0, t)),  # lane-dense x tile
            ],
            out_specs=pl.BlockSpec((nb, C, tl), lambda n, t: (n, 0, t)),
        ),
        compiler_params=pltpu.CompilerParams(
            dimension_semantics=("parallel", "parallel"),
            vmem_limit_bytes=vmem_limit,
        ),
        cost_estimate=pl.CostEstimate(
            flops=2 * N * C * C * HW,
            transcendentals=0,
            bytes_accessed=2 * N * C * HW * itemsize + C * C * itemsize,
        ),
    )(weight, x3)

    y = y3.reshape(N, C, H, W)

    # logdet of tiny (C, C) matrix -> plain JAX.  Match torch.logdet semantics:
    # det < 0 -> NaN, det == 0 -> -inf, det > 0 -> log(det).
    sign, logabsdet = jnp.linalg.slogdet(weight)
    logdet_w = jnp.where(sign > 0, logabsdet, jnp.where(sign == 0, -jnp.inf, jnp.nan))
    log_det_jac = log_det_jac + logdet_w * HW

    return y, log_det_jac, z


if __name__ == "__main__":
    key = jax.random.PRNGKey(0)
    k_x, k_w, k_ldj, k_z = jax.random.split(key, 4)

    N, C, H, W = 2, 4, 16, 16

    # Deterministic orthogonal init (QR of random Gaussian), mirroring __init__.
    w_rand = jax.random.normal(k_w, (C, C), dtype=jnp.float32)
    weight, _ = jnp.linalg.qr(w_rand)
    # WaveGlow-style sign fix: force det(W) = +1 so logdet is finite (QR gives det = -1
    # for ~half the seeds, which torch.logdet maps to NaN).
    det_sign, _ = jnp.linalg.slogdet(weight)
    weight = weight.at[:, 0].multiply(jnp.where(det_sign < 0, -1.0, 1.0))
    weight = weight.astype(jnp.float32)

    x = jax.random.normal(k_x, (N, C, H, W), dtype=jnp.float32)
    log_det_jac = jax.random.normal(k_ldj, (N,), dtype=jnp.float32)
    z = jax.random.normal(k_z, (N, C, H, W), dtype=jnp.float32)

    y, ldj, z_out = invertable_1x1_conv_forward(x, log_det_jac, z, weight)
    jax.block_until_ready((y, ldj, z_out))

    # Reference check (pure JAX), using the same torch.logdet semantics as the wrapper.
    y_ref = jnp.einsum("oc,nchw->nohw", weight, x)
    assert jnp.allclose(y, y_ref, atol=1e-5, rtol=1e-5)
    sign_r, logabs_r = jnp.linalg.slogdet(weight)
    logdet_ref = jnp.where(sign_r > 0, logabs_r, jnp.where(sign_r == 0, -jnp.inf, jnp.nan))
    ldj_ref = log_det_jac + logdet_ref * (H * W)
    assert jnp.allclose(ldj, ldj_ref, atol=1e-5, rtol=1e-5)
    assert jnp.array_equal(z_out, z)

    print("KERNEL_OK")
</pallas_src>

<mosaic_0001>
module attributes {stable_mosaic.version = 11 : i64} {
  func.func @_conv1x1_kernel(%arg0: i32, %arg1: i32, %arg2: memref<4x4xf32, #tpu.memory_space<vmem>>, %arg3: memref<1x4x256xf32, #tpu.memory_space<vmem>>, %arg4: memref<1x4x256xf32, #tpu.memory_space<vmem>>) attributes {dimension_semantics = [#tpu.dimension_semantics<parallel>, #tpu.dimension_semantics<parallel>], iteration_bounds = array<i64: 2, 1>, scalar_prefetch = 0 : i64, scratch_operands = 0 : i64, tpu.core_type = #tpu.core_type<tc>, window_params = [{pipeline_mode = #tpu.pipeline_mode<synchronous>, transform_indices = @transform_0, window_bounds = array<i64: 4, 4>}, {transform_indices = @transform_1, window_bounds = array<i64: 1, 4, 256>}, {transform_indices = @transform_2, window_bounds = array<i64: 1, 4, 256>}]} {
    %c0 = arith.constant 0 : index
    %c0_0 = arith.constant 0 : index
    %0 = vector.load %arg2[%c0, %c0_0] : memref<4x4xf32, #tpu.memory_space<vmem>>, vector<4x4xf32>
    %c0_1 = arith.constant 0 : index
    %c0_2 = arith.constant 0 : index
    %c0_3 = arith.constant 0 : index
    %1 = vector.load %arg3[%c0_1, %c0_2, %c0_3] : memref<1x4x256xf32, #tpu.memory_space<vmem>>, vector<1x4x256xf32>
    %2 = vector.shape_cast %1 : vector<1x4x256xf32> to vector<4x256xf32>
    %cst = arith.constant dense<0.000000e+00> : vector<4x256xf32>
    %3 = tpu.matmul %0, %2, %cst {dimension_numbers = #tpu.dot_dimension_numbers<[1], [0], [0], [1], [0, 0, 1, 1], [], []>} : vector<4x4xf32>, vector<4x256xf32>, vector<4x256xf32> -> vector<4x256xf32>
    %c0_4 = arith.constant 0 : index
    %c0_5 = arith.constant 0 : index
    %c0_6 = arith.constant 0 : index
    %4 = vector.load %arg4[%c0_4, %c0_5, %c0_6] : memref<1x4x256xf32, #tpu.memory_space<vmem>>, vector<1x4x256xf32>
    %5 = vector.shape_cast %4 : vector<1x4x256xf32> to vector<4x256xf32>
    %6 = vector.shape_cast %3 : vector<4x256xf32> to vector<1x4x256xf32>
    tpu.vector_store %arg4[%c0_4, %c0_5, %c0_6], %6 {strides = array<i32>} : memref<1x4x256xf32, #tpu.memory_space<vmem>>, vector<1x4x256xf32>,
    return
  }
  func.func @transform_0(%arg0: i32, %arg1: i32) -> (i32, i32) {
    %c0_i32 = arith.constant 0 : i32
    %c0_i32_0 = arith.constant 0 : i32
    %c0_i32_1 = arith.constant 0 : i32
    return %c0_i32, %c0_i32_0 : i32, i32
  }
  func.func @transform_1(%arg0: i32, %arg1: i32) -> (i32, i32, i32) {
    %c0_i32 = arith.constant 0 : i32
    %c0_i32_0 = arith.constant 0 : i32
    return %arg0, %c0_i32, %arg1 : i32, i32, i32
  }
  func.func @transform_2(%arg0: i32, %arg1: i32) -> (i32, i32, i32) {
    %c0_i32 = arith.constant 0 : i32
    %c0_i32_0 = arith.constant 0 : i32
    return %arg0, %c0_i32, %arg1 : i32, i32, i32
  }
}

</mosaic_0001>

<llo_original>
// kernel: custom-call.2
$region0: #{custom-call.2}
  %s0 = inlined_call_operand.vmem [shape: f32[4,4], index: 0, kind: input, shape index: {}]
  %s1 = inlined_call_operand.vmem [shape: f32[4,4], index: 1, kind: output, shape index: {0}]
  %s2 = inlined_call_operand.vmem [shape: s32[4], index: 2, kind: output, shape index: {1}]
  %s3 = inlined_call_operand.hbm [shape: s32[4], index: 3, kind: output, shape index: {2}]
  %4 = xla_tuple %s1, %s2, %s3
  $region1: #{custom-call.2} parent=0
    #allocation0 [shape = 'u8[4096]{0}', space=vmem, size = 0x1000, scoped, tag = 'operand span for operand 0']
    #allocation1 [shape = 'u8[2048]{0}', space=vmem, size = 0x800, scoped, tag = 'packed  for operand 0']
    #allocation2 [shape = 'u8[4096]{0}', space=vmem, size = 0x1000, scoped, tag = 'operand span for operand 1']
    #allocation3 [shape = 'u8[2048]{0}', space=vmem, size = 0x800, scoped, tag = 'packed  for operand 1']
    #allocation4 [shape = 'u8[4096]{0}', space=vmem, size = 0x1000, scoped, tag = 'operand span for operand 2']
    #allocation5 [shape = 'u8[512]{0}', space=vmem, size = 0x400, scoped, tag = 'packed  for operand 2']
    #allocation6 [shape = 'u8[4096]{0}', space=vmem, size = 0x1000, scoped, tag = 'operand span for operand 3']
    #allocation7 [shape = 'u8[512]{0}', space=vmem, size = 0x400, scoped, tag = 'packed  for operand 3']
    #allocation8 [shape = 's32[1]{0}', space=sflag, size = 0x4, scoped, tag = 'scoped memory for custom-call.2']
    #allocation9 [shape = 's32[4,128]{1,0}', space=vmem, size = 0x1000, scoped, tag = 'scratch for permutations']
    %5 = vsyncpa [#allocation8], 0
    %p7 = scmp.gt.s32.totalorder 4, 0
    // Predicated region
    $region2: #{custom-call.2} parent=1 // pred_check
      %p8 = pneg %p7
    $region3: #{custom-call.2} parent=1 // pred_check_branch
      %10 = sbr.rel (%p8) target = $region5
    $region4: #{custom-call.2} parent=1 // pred_region
      %s11 = sshra.s32 4, 3
      %p12 = scmp.gt.s32.totalorder %s11, 0
      // Predicated region
      $region6: #{custom-call.2} parent=4 // pred_check
        %p13 = pneg %p12
      $region7: #{custom-call.2} parent=4 // pred_check_branch
        %15 = sbr.rel (%p13) target = $region9
      $region8: #{custom-call.2} parent=4 // pred_region
        %s16 = ssub.s32 %s11, 1
        %s17 = smul.u32 %s16, 128
        %s18 = sshra.s32 %s17, 4
        %s19 = scalar_lea.vmem %s0, %s18
        %v20 = vld [vmem:[%s0] sm:$0xff]
        // While loop
        $region10: #{custom-call.2} parent=8 // loop_pre_header
          _
        $region11: #{custom-call.2} parent=8 // loop_header
          %s21 = sphi %s0, %s43
          %s22 = sphi [#allocation1], %s44
          %v23 = vphi %v20, %v45
          %s24 = ssub.s32 %s19, 64
          %p25 = scmp.gt.s32.totalorder %s21, %s24
        $region12: #{custom-call.2} parent=8 // loop_header_branch
          %27 = sbr.rel (%p25) target = $region16
        $region13: #{custom-call.2} parent=8 // loop_body
          %28 = vst [vmem:[%s22] sm:$0xff] %v23
          %v29 = vld [vmem:[%s21 + $0x8] sm:$0xff]
          %30 = vst [vmem:[%s22 + $0x8] sm:$0xff] %v29
          %v31 = vld [vmem:[%s21 + $0x10] sm:$0xff]
          %32 = vst [vmem:[%s22 + $0x10] sm:$0xff] %v31
          %v33 = vld [vmem:[%s21 + $0x18] sm:$0xff]
          %34 = vst [vmem:[%s22 + $0x18] sm:$0xff] %v33
          %v35 = vld [vmem:[%s21 + $0x20] sm:$0xff]
          %36 = vst [vmem:[%s22 + $0x20] sm:$0xff] %v35
          %v37 = vld [vmem:[%s21 + $0x28] sm:$0xff]
          %38 = vst [vmem:[%s22 + $0x28] sm:$0xff] %v37
          %v39 = vld [vmem:[%s21 + $0x30] sm:$0xff]
          %40 = vst [vmem:[%s22 + $0x30] sm:$0xff] %v39
          %v41 = vld [vmem:[%s21 + $0x38] sm:$0xff]
          %42 = vst [vmem:[%s22 + $0x38] sm:$0xff] %v41
        $region14: #{custom-call.2} parent=8 // loop_footer
          %s43 = scalar_lea.vmem %s21, 64
          %s44 = scalar_lea.vmem %s22, 64
          %v45 = vld [vmem:[%s21 + $0x40] sm:$0xff]
        $region15: #{custom-call.2} parent=8 // loop_footer_branch
          %46 = sbr.rel target = $region11
        $region16: #{custom-call.2} parent=8 // loop_exit
          _
        // While loop
        $region17: #{custom-call.2} parent=8 // loop_pre_header
          _
        $region18: #{custom-call.2} parent=8 // loop_header
          %s47 = sphi %s21, %s55
          %s48 = sphi %s22, %s56
          %v49 = vphi %v23, %v49
          %p50 = scmp.gt.s32.totalorder %s47, %s19
        $region19: #{custom-call.2} parent=8 // loop_header_branch
          %52 = sbr.rel (%p50) target = $region23
        $region20: #{custom-call.2} parent=8 // loop_body
          %v53 = vld [vmem:[%s47] sm:$0xff]
          %54 = vst [vmem:[%s48] sm:$0xff] %v53
        $region21: #{custom-call.2} parent=8 // loop_footer
          %s55 = scalar_lea.vmem %s47, 8
          %s56 = scalar_lea.vmem %s48, 8
        $region22: #{custom-call.2} parent=8 // loop_footer_branch
          %57 = sbr.rel target = $region18
        $region23: #{custom-call.2} parent=8 // loop_exit
          _
      $region9: #{custom-call.2} parent=4 // pred_fallthru
        _
      %s58 = sand.u32 4, 7
      %s59 = sshllo.u32 0, %s58
      %s60 = smul.u32 %s11, 128
      %s61 = sshra.s32 %s60, 4
      %s62 = scalar_lea.vmem [#allocation1], %s61
      %s63 = smul.u32 %s11, 128
      %s64 = sshra.s32 %s63, 4
      %s65 = scalar_lea.vmem %s0, %s64
      %v66 = vld [vmem:[%s65] sm:%s59]
      %67 = vst [vmem:[%s62] sm:%s59] %v66
    $region5: #{custom-call.2} parent=1 // pred_fallthru
      _
    %s69 = sshllo.u32 0, 4
    %v70 = vld [vmem:[#allocation1] sm:%s69]
    %71 = vst [vmem:[#allocation0] sm:%s69] %v70
    %v72 = vld [vmem:[#allocation0] sm:$0xff]
    %73 = vst [vmem:[#allocation2] sm:$0xff] %v72
    %74 = vst [vmem:[#allocation4] sm:$0x1] 0
    %v75 = vlaneseq
    %v76 = vshrl.u32 %v75, 7
    %v77 = vmov %v76
    %79 = vst [vmem:[#allocation9] sm:$0xff] %v77
    loop: start=0, step=1, limit=4
    $region25: #{custom-call.2} parent=1 // loop_pre_header
      _
    $region26: #{custom-call.2} parent=1 // loop_header
      %s81 = sphi 0, %s85
      %p82 = scmp.ge.s32.totalorder %s81, 4
    $region27: #{custom-call.2} parent=1 // loop_header_branch
      %84 = sbr.rel (%p82) target = $region31
    $region28: #{custom-call.2} parent=1 // loop_body
      %v86 = vstv %s81
      %v87 = vlaneseq
      %v88 = vshrl.u32 %v87, 7
      %v89 = vmov %v88
      %v90 = vld [vmem:[#allocation2] sm:$0xff]
      %v91 = vand.u32 2147483647, %v90
      %v93 = vstv %s81
      %vm94 = vcmp.ge.s32.totalorder %v89, %v93
      %vm95 = vcmp.lt.s32.totalorder %v89, 4
      %vm96 = vmand %vm94, %vm95
      %vm97 = vcmp.lt.f32.partialorder -inf, %v91
      %vm98 = vmand %vm96, %vm97
      %v99 = vsel %vm98, %v89, %v86
      %v100 = vsel %vm98, %v91, -inf
      %v101 = vrot.slane %v100, 1
      %v102 = vrot.slane %v99, 1
      %vm103 = vcmp.ge.f32.partialorder %v101, %v100
      %v104 = vsel %vm103, %v101, %v100
      %v105 = vsel %vm103, %v102, %v99
      %v106 = vrot.slane %v101, 1
      %v107 = vrot.slane %v102, 1
      %vm108 = vcmp.ge.f32.partialorder %v106, %v104
      %v109 = vsel %vm108, %v106, %v104
      %v110 = vsel %vm108, %v107, %v105
      %v111 = vrot.slane %v106, 1
      %v112 = vrot.slane %v107, 1
      %vm113 = vcmp.ge.f32.partialorder %v111, %v109
      %v114 = vsel %vm113, %v111, %v109
      %v115 = vsel %vm113, %v112, %v110
      %v116 = vrot.slane %v111, 1
      %v117 = vrot.slane %v112, 1
      %vm118 = vcmp.ge.f32.partialorder %v116, %v114
      %v119 = vsel %vm118, %v116, %v114
      %v120 = vsel %vm118, %v117, %v115
      %v121 = vrot.slane %v116, 1
      %v122 = vrot.slane %v117, 1
      %vm123 = vcmp.ge.f32.partialorder %v121, %v119
      %v124 = vsel %vm123, %v121, %v119
      %v125 = vsel %vm123, %v122, %v120
      %v126 = vrot.slane %v121, 1
      %v127 = vrot.slane %v122, 1
      %vm128 = vcmp.ge.f32.partialorder %v126, %v124
      %v129 = vsel %vm128, %v126, %v124
      %v130 = vsel %vm128, %v127, %v125
      %v131 = vrot.slane %v126, 1
      %v132 = vrot.slane %v127, 1
      %vm133 = vcmp.ge.f32.partialorder %v131, %v129
      %v134 = vsel %vm133, %v131, %v129
      %v135 = vsel %vm133, %v132, %v130
      %s136 = ssub.s32 128, %s81
      %137 = vrot.lane.b32.xlu0 %v135, %s136
      %v138 = vpop.permute.xlu0 %137
      %s139 = vtos %v138
      %v140 = vstv %s81
      %v141 = vlaneseq
      %v142 = vand.u32 %v141, 127
      %vm143 = vcmp.eq.s32.totalorder %v142, %v140
      %v144 = vstv %s139
      %v145 = vld [vmem:[#allocation4] ss:$0 sm:$0xff]
      %v146 = vsel %vm143, %v144, %v145
      %147 = vst [vmem:[#allocation4] sm:$0x1] %v146
      %s148 = scalar_lea.vmem [#allocation2], %s81
      %s149 = scalar_lea.vmem [#allocation2], %s139
      %v150 = vld [vmem:[%s148] ss:$0 sm:$0xff]
      %v151 = vld [vmem:[%s149] ss:$0 sm:$0xff]
      %152 = vst [vmem:[%s149] sm:$0x1] %v150
      %153 = vst [vmem:[%s148] sm:$0x1] %v151
      %s154 = scalar_lea.vmem [#allocation9], %s81
      %s155 = scalar_lea.vmem [#allocation9], %s139
      %v156 = vld [vmem:[%s154] ss:$0 sm:$0xff]
      %v157 = vld [vmem:[%s155] ss:$0 sm:$0xff]
      %158 = vst [vmem:[%s155] sm:$0x1] %v156
      %159 = vst [vmem:[%s154] sm:$0x1] %v157
      %vm160 = vcmp.ne.f32.partialorder %v151, 0.0
      %vm161 = vmand %vm143, %vm160
      %v162 = vsel %vm161, %v151, 1.0
      %v163 = vlaneseq
      %v164 = vand.u32 %v163, 127
      %v165 = vstv %s81
      %vm166 = vcmp.gt.s32.totalorder %v164, %v165
      %v167 = vsel %vm166, %v151, 0.0
      %v168 = vlaneseq
      %v169 = vshrl.u32 %v168, 7
      %v170 = vmov %v169
      %v171 = vld [vmem:[#allocation2] sm:$0xff]
      %v173 = vstv %s81
      %vm174 = vcmp.gt.s32.totalorder %v170, %v173
      %v175 = vsel %vm174, %v162, 1.0
      %v176 = vrcp.pop %v175
      %v177 = vmul.f32 %v171, %v176
      %vm178 = vmand %vm174, %vm143
      %v179 = vsel %vm178, %v177, 0.0
      %180 = vadd.xlane.f32.xlu0 %v179
      %v181 = vpop.xlane.xlu0 %180
      %v182 = vmul.f32 %v181, %v167
      %v183 = vsub.f32 %v177, %v182
      %184 = vst [vmem:[#allocation2] sm:$0xff] %v183
    $region29: #{custom-call.2} parent=1 // loop_footer
      %s85 = sadd.s32 1, %s81
    $region30: #{custom-call.2} parent=1 // loop_footer_branch
      %80 = sbr.rel target = $region26
    $region31: #{custom-call.2} parent=1 // loop_exit
      _
    %v185 = vld [vmem:[#allocation9] sm:$0xff]
    %s186 = scalar_lea.vmem [#allocation9], 8
    %s187 = scalar_lea.vmem [#allocation9], 16
    %s188 = scalar_lea.vmem [#allocation9], 24
    %s189 = scalar_lea.vmem [#allocation9], 32
    %s190 = scalar_lea.vmem [#allocation9], 40
    %s191 = scalar_lea.vmem [#allocation9], 48
    %s192 = scalar_lea.vmem [#allocation9], 56
    %s193 = scalar_lea.vmem [#allocation9], 64
    %s194 = scalar_lea.vmem [#allocation9], 72
    %s195 = scalar_lea.vmem [#allocation9], 80
    %s196 = scalar_lea.vmem [#allocation9], 88
    %s197 = scalar_lea.vmem [#allocation9], 96
    %s198 = scalar_lea.vmem [#allocation9], 104
    %s199 = scalar_lea.vmem [#allocation9], 112
    %s200 = scalar_lea.vmem [#allocation9], 120
    %201 = vxpose.xlu0.b32.start [1/16] %v185, 128
    %202 = vxpose.xlu0.b32.cont [2/16] 0, 128
    %203 = vxpose.xlu0.b32.cont [3/16] 0, 128
    %204 = vxpose.xlu0.b32.cont [4/16] 0, 128
    %205 = vxpose.xlu0.b32.cont [5/16] 0, 128
    %206 = vxpose.xlu0.b32.cont [6/16] 0, 128
    %207 = vxpose.xlu0.b32.cont [7/16] 0, 128
    %208 = vxpose.xlu0.b32.cont [8/16] 0, 128
    %209 = vxpose.xlu0.b32.cont [9/16] 0, 128
    %210 = vxpose.xlu0.b32.cont [10/16] 0, 128
    %211 = vxpose.xlu0.b32.cont [11/16] 0, 128
    %212 = vxpose.xlu0.b32.cont [12/16] 0, 128
    %213 = vxpose.xlu0.b32.cont [13/16] 0, 128
    %214 = vxpose.xlu0.b32.cont [14/16] 0, 128
    %215 = vxpose.xlu0.b32.cont [15/16] 0, 128
    %216 = vxpose.xlu0.b32.end [16/16] 0, 128
    %v217 = vpop.trf.xlu0
    %v218 = vpop.trf.xlu0
    %v219 = vpop.trf.xlu0
    %v220 = vpop.trf.xlu0
    %v221 = vpop.trf.xlu0
    %v222 = vpop.trf.xlu0
    %v223 = vpop.trf.xlu0
    %v224 = vpop.trf.xlu0
    %v225 = vpop.trf.xlu0
    %v226 = vpop.trf.xlu0
    %v227 = vpop.trf.xlu0
    %v228 = vpop.trf.xlu0
    %v229 = vpop.trf.xlu0
    %v230 = vpop.trf.xlu0
    %v231 = vpop.trf.xlu0
    %v232 = vpop.trf.xlu0
    %233 = vst [vmem:[#allocation6] sm:$0x1] %v217
    %s235 = sshllo.u32 0, 4
    %v237 = vld [vmem:[#allocation2] sm:%s235]
    %s238 = sshllo.u32 0, 4
    %239 = vst [vmem:[#allocation3] sm:%s238] %v237
    %s241 = sshllo.u32 0, 1
    %v243 = vld [vmem:[#allocation4] sm:%s241]
    %s244 = sshllo.u32 0, 1
    %245 = vst [vmem:[#allocation5] sm:%s244] %v243
    %s247 = sshllo.u32 0, 1
    %v249 = vld [vmem:[#allocation6] sm:%s247]
    %s250 = sshllo.u32 0, 1
    %251 = vst [vmem:[#allocation7] sm:%s250] %v249
    %p253 = scmp.gt.s32.totalorder 4, 0
    // Predicated region
    $region32: #{custom-call.2} parent=1 // pred_check
      %p254 = pneg %p253
    $region33: #{custom-call.2} parent=1 // pred_check_branch
      %256 = sbr.rel (%p254) target = $region35
    $region34: #{custom-call.2} parent=1 // pred_region
      %s257 = sshra.s32 4, 3
      %p258 = scmp.gt.s32.totalorder %s257, 0
      // Predicated region
      $region36: #{custom-call.2} parent=34 // pred_check
        %p259 = pneg %p258
      $region37: #{custom-call.2} parent=34 // pred_check_branch
        %261 = sbr.rel (%p259) target = $region39
      $region38: #{custom-call.2} parent=34 // pred_region
        %s262 = ssub.s32 %s257, 1
        %s263 = smul.u32 %s262, 128
        %s264 = sshra.s32 %s263, 4
        %s265 = scalar_lea.vmem [#allocation3], %s264
        %v266 = vld [vmem:[#allocation3] sm:$0xff]
        // While loop
        $region40: #{custom-call.2} parent=38 // loop_pre_header
          _
        $region41: #{custom-call.2} parent=38 // loop_header
          %s267 = sphi [#allocation3], %s289
          %s268 = sphi %s1, %s290
          %v269 = vphi %v266, %v291
          %s270 = ssub.s32 %s265, 64
          %p271 = scmp.gt.s32.totalorder %s267, %s270
        $region42: #{custom-call.2} parent=38 // loop_header_branch
          %273 = sbr.rel (%p271) target = $region46
        $region43: #{custom-call.2} parent=38 // loop_body
          %274 = vst [vmem:[%s268] sm:$0xff] %v269
          %v275 = vld [vmem:[%s267 + $0x8] sm:$0xff]
          %276 = vst [vmem:[%s268 + $0x8] sm:$0xff] %v275
          %v277 = vld [vmem:[%s267 + $0x10] sm:$0xff]
          %278 = vst [vmem:[%s268 + $0x10] sm:$0xff] %v277
          %v279 = vld [vmem:[%s267 + $0x18] sm:$0xff]
          %280 = vst [vmem:[%s268 + $0x18] sm:$0xff] %v279
          %v281 = vld [vmem:[%s267 + $0x20] sm:$0xff]
          %282 = vst [vmem:[%s268 + $0x20] sm:$0xff] %v281
          %v283 = vld [vmem:[%s267 + $0x28] sm:$0xff]
          %284 = vst [vmem:[%s268 + $0x28] sm:$0xff] %v283
          %v285 = vld [vmem:[%s267 + $0x30] sm:$0xff]
          %286 = vst [vmem:[%s268 + $0x30] sm:$0xff] %v285
          %v287 = vld [vmem:[%s267 + $0x38] sm:$0xff]
          %288 = vst [vmem:[%s268 + $0x38] sm:$0xff] %v287
        $region44: #{custom-call.2} parent=38 // loop_footer
          %s289 = scalar_lea.vmem %s267, 64
          %s290 = scalar_lea.vmem %s268, 64
          %v291 = vld [vmem:[%s267 + $0x40] sm:$0xff]
        $region45: #{custom-call.2} parent=38 // loop_footer_branch
          %292 = sbr.rel target = $region41
        $region46: #{custom-call.2} parent=38 // loop_exit
          _
        // While loop
        $region47: #{custom-call.2} parent=38 // loop_pre_header
          _
        $region48: #{custom-call.2} parent=38 // loop_header
          %s293 = sphi %s267, %s301
          %s294 = sphi %s268, %s302
          %v295 = vphi %v269, %v295
          %p296 = scmp.gt.s32.totalorder %s293, %s265
        $region49: #{custom-call.2} parent=38 // loop_header_branch
          %298 = sbr.rel (%p296) target = $region53
        $region50: #{custom-call.2} parent=38 // loop_body
          %v299 = vld [vmem:[%s293] sm:$0xff]
          %300 = vst [vmem:[%s294] sm:$0xff] %v299
        $region51: #{custom-call.2} parent=38 // loop_footer
          %s301 = scalar_lea.vmem %s293, 8
          %s302 = scalar_lea.vmem %s294, 8
        $region52: #{custom-call.2} parent=38 // loop_footer_branch
          %303 = sbr.rel target = $region48
        $region53: #{custom-call.2} parent=38 // loop_exit
          _
      $region39: #{custom-call.2} parent=34 // pred_fallthru
        _
      %s304 = sand.u32 4, 7
      %s305 = sshllo.u32 0, %s304
      %s306 = smul.u32 %s257, 128
      %s307 = sshra.s32 %s306, 4
      %s308 = scalar_lea.vmem %s1, %s307
      %s309 = smul.u32 %s257, 128
      %s310 = sshra.s32 %s309, 4
      %s311 = scalar_lea.vmem [#allocation3], %s310
      %v312 = vld [vmem:[%s311] sm:%s305]
      %313 = vst [vmem:[%s308] sm:%s305] %v312
    $region35: #{custom-call.2} parent=1 // pred_fallthru
      _
    // Predicated region
    $region54: #{custom-call.2} parent=1 // pred_check
      _
    $region55: #{custom-call.2} parent=1 // pred_check_branch
      %315 = sbr.rel (0) target = $region57
    $region56: #{custom-call.2} parent=1 // pred_region
      %p317 = scmp.gt.s32.totalorder 1, 0
      // Predicated region
      $region58: #{custom-call.2} parent=56 // pred_check
        %p318 = pneg %p317
      $region59: #{custom-call.2} parent=56 // pred_check_branch
        %320 = sbr.rel (%p318) target = $region61
      $region60: #{custom-call.2} parent=56 // pred_region
        %s321 = sshra.s32 1, 3
        %p322 = scmp.gt.s32.totalorder %s321, 0
        // Predicated region
        $region62: #{custom-call.2} parent=60 // pred_check
          %p323 = pneg %p322
        $region63: #{custom-call.2} parent=60 // pred_check_branch
          %325 = sbr.rel (%p323) target = $region65
        $region64: #{custom-call.2} parent=60 // pred_region
          %s326 = ssub.s32 %s321, 1
          %s327 = smul.u32 %s326, 128
          %s328 = sshra.s32 %s327, 4
          %s329 = scalar_lea.vmem [#allocation5], %s328
          %v330 = vld [vmem:[#allocation5] sm:$0xff]
          // While loop
          $region66: #{custom-call.2} parent=64 // loop_pre_header
            _
          $region67: #{custom-call.2} parent=64 // loop_header
            %s331 = sphi [#allocation5], %s353
            %s332 = sphi %s2, %s354
            %v333 = vphi %v330, %v355
            %s334 = ssub.s32 %s329, 64
            %p335 = scmp.gt.s32.totalorder %s331, %s334
          $region68: #{custom-call.2} parent=64 // loop_header_branch
            %337 = sbr.rel (%p335) target = $region72
          $region69: #{custom-call.2} parent=64 // loop_body
            %338 = vst [vmem:[%s332] sm:$0xff] %v333
            %v339 = vld [vmem:[%s331 + $0x8] sm:$0xff]
            %340 = vst [vmem:[%s332 + $0x8] sm:$0xff] %v339
            %v341 = vld [vmem:[%s331 + $0x10] sm:$0xff]
            %342 = vst [vmem:[%s332 + $0x10] sm:$0xff] %v341
            %v343 = vld [vmem:[%s331 + $0x18] sm:$0xff]
            %344 = vst [vmem:[%s332 + $0x18] sm:$0xff] %v343
            %v345 = vld [vmem:[%s331 + $0x20] sm:$0xff]
            %346 = vst [vmem:[%s332 + $0x20] sm:$0xff] %v345
            %v347 = vld [vmem:[%s331 + $0x28] sm:$0xff]
            %348 = vst [vmem:[%s332 + $0x28] sm:$0xff] %v347
            %v349 = vld [vmem:[%s331 + $0x30] sm:$0xff]
            %350 = vst [vmem:[%s332 + $0x30] sm:$0xff] %v349
            %v351 = vld [vmem:[%s331 + $0x38] sm:$0xff]
            %352 = vst [vmem:[%s332 + $0x38] sm:$0xff] %v351
          $region70: #{custom-call.2} parent=64 // loop_footer
            %s353 = scalar_lea.vmem %s331, 64
            %s354 = scalar_lea.vmem %s332, 64
            %v355 = vld [vmem:[%s331 + $0x40] sm:$0xff]
          $region71: #{custom-call.2} parent=64 // loop_footer_branch
            %356 = sbr.rel target = $region67
          $region72: #{custom-call.2} parent=64 // loop_exit
            _
          // While loop
          $region73: #{custom-call.2} parent=64 // loop_pre_header
            _
          $region74: #{custom-call.2} parent=64 // loop_header
            %s357 = sphi %s331, %s365
            %s358 = sphi %s332, %s366
            %v359 = vphi %v333, %v359
            %p360 = scmp.gt.s32.totalorder %s357, %s329
          $region75: #{custom-call.2} parent=64 // loop_header_branch
            %362 = sbr.rel (%p360) target = $region79
          $region76: #{custom-call.2} parent=64 // loop_body
            %v363 = vld [vmem:[%s357] sm:$0xff]
            %364 = vst [vmem:[%s358] sm:$0xff] %v363
          $region77: #{custom-call.2} parent=64 // loop_footer
            %s365 = scalar_lea.vmem %s357, 8
            %s366 = scalar_lea.vmem %s358, 8
          $region78: #{custom-call.2} parent=64 // loop_footer_branch
            %367 = sbr.rel target = $region74
          $region79: #{custom-call.2} parent=64 // loop_exit
            _
        $region65: #{custom-call.2} parent=60 // pred_fallthru
          _
        %s368 = sand.u32 1, 7
        %s369 = sshllo.u32 0, %s368
        %s370 = smul.u32 %s321, 128
        %s371 = sshra.s32 %s370, 4
        %s372 = scalar_lea.vmem %s2, %s371
        %s373 = smul.u32 %s321, 128
        %s374 = sshra.s32 %s373, 4
        %s375 = scalar_lea.vmem [#allocation5], %s374
        %v376 = vld [vmem:[%s375] sm:%s369]
        %377 = vst [vmem:[%s372] sm:%s369] %v376
      $region61: #{custom-call.2} parent=56 // pred_fallthru
        _
    $region57: #{custom-call.2} parent=1 // pred_fallthru
      _
    // Predicated region
    $region80: #{custom-call.2} parent=1 // pred_check
      _
    $region81: #{custom-call.2} parent=1 // pred_check_branch
      %379 = sbr.rel (0) target = $region83
    $region82: #{custom-call.2} parent=1 // pred_region
      %s381 = ssub.s32 16, 16
      %382 = vsyncadd [#allocation8], %s381
      %s383 = sshll.u32 [#allocation7], 4
      %s384 = int_to_ptr.vmem [resolvable:$true] %s383
      %386 = dma.vmem_to_hbm [thread:$0]  %s384, 16, %s3, [#allocation8]
    $region83: #{custom-call.2} parent=1 // pred_fallthru
      _
    // Predicated region
    $region84: #{custom-call.2} parent=1 // pred_check
      _
    $region85: #{custom-call.2} parent=1 // pred_check_branch
      %388 = sbr.rel (0) target = $region87
    $region86: #{custom-call.2} parent=1 // pred_region
      _
    $region87: #{custom-call.2} parent=1 // pred_fallthru
      _
    // Predicated region
    $region88: #{custom-call.2} parent=1 // pred_check
      _
    $region89: #{custom-call.2} parent=1 // pred_check_branch
      %390 = sbr.rel (0) target = $region91
    $region90: #{custom-call.2} parent=1 // pred_region
      %391 = dma.done [#allocation8], 16
    $region91: #{custom-call.2} parent=1 // pred_fallthru
      _
    %392 = vsyncpa [#allocation8], 1

// kernel: invertable_1x1_conv_forward.1
$region0: #{invertable_1x1_conv_forward.1}
  #allocation0 [shape = 'u32[]', space=smem, size = 0x4, offset = 0x4, fixed_abs, tag = 'smem constant byte address 0x4 - core index']
  #allocation1 [shape = 'u32[144,128]{1,0:T(1,128)}', space=vmem, size = 0x12000, scoped, tag = 'internal scratch']
  %s0 = inlined_call_operand.vmem [shape: f32[4,4], index: 0, kind: input, shape index: {}]
  %s1 = inlined_call_operand.vmem [shape: f32[2,4,256], index: 1, kind: input, shape index: {}]
  %s2 = inlined_call_operand.vmem [shape: f32[2,4,256], index: 2, kind: output, shape index: {}]
  %s3 = sld [smem:[#allocation0]]
  $region41: #{invertable_1x1_conv_forward.1} parent=0
    _
  %s5 = ssub.s32 1, %s3
  %s6 = scalar_select 0, %s5, %s3
  loop: start=0, step=1, limit=4
  $region2: #{invertable_1x1_conv_forward.1} parent=0 // loop_pre_header
    _
  $region3: #{invertable_1x1_conv_forward.1} parent=0 // loop_header
    %s8 = sphi 0, %s12
    %p9 = scmp.ge.s32.totalorder %s8, 4
    %s15 = sphi 0, %s27
    %s16 = sphi 0, %s23
    %s17 = sphi 0, %s15
    %s18 = sphi 0, %s16
    %s19 = sphi 0, %s17
    %s20 = sphi 0, %s18
    %s28 = sphi 0, %s28
    %s30 = sphi 0, %s28
    %s31 = sphi 0, %s30
    %s45 = sphi 0, %s31
    %s53 = sphi 0, %s55
    %s56 = sphi 0, %s53
    %s57 = sphi 0, %s56
    %s73 = sphi 0, %s57
    %s81 = sphi 0, %s83
    %s84 = sphi 0, %s81
    %s85 = sphi 0, %s84
    %s101 = sphi 0, %s85
  $region4: #{invertable_1x1_conv_forward.1} parent=0 // loop_header_branch
    %11 = sbr.rel (%p9) target = $region8
  $region5: #{invertable_1x1_conv_forward.1} parent=0 // loop_body
    %s13 = ssub.s32 %s8, 1
    %s14 = ssub.s32 %s8, 2
    %s21 = sadd.s32 1, %s16
    %p22 = scmp.ge.s32.totalorder %s21, 1
    %s23 = scalar_select %p22, 0, %s21
    %s24 = sadd.s32 1, %s15
    %s25 = scalar_select %p22, %s24, %s15
    %p26 = scmp.ge.s32.totalorder %s25, 2
    %s27 = scalar_select %p26, 0, %s25
    %s29 = sadd.s32 %s28, 1
    %p32 = scmp.eq.s32.totalorder %s8, 1
    %p33 = scmp.ne.s32.totalorder %s28, %s30
    %p34 = scmp.eq.s32.totalorder %s8, 0
    %p35 = por %p33, %p34
    %p36 = scmp.ne.s32.totalorder %s28, %s30
    %p37 = scmp.eq.s32.totalorder %s13, 1
    %p38 = por %p36, %p37
    %p39 = scmp.ne.s32.totalorder %s30, %s31
    %p40 = scmp.eq.s32.totalorder %s13, 0
    %p41 = por %p39, %p40
    %p42 = scmp.ne.s32.totalorder %s30, %s31
    %p43 = scmp.eq.s32.totalorder %s14, 1
    %p44 = por %p42, %p43
    %p46 = scmp.ne.s32.totalorder %s31, %s45
    %p47 = scmp.eq.s32.totalorder %s14, 0
    %p48 = por %p46, %p47
    %s49 = ssub.s32 %s15, %s27
    %s50 = ssub.s32 %s16, %s23
    %s51 = sor.u32 %s49, %s50
    %p52 = scmp.eq.s32.totalorder %s51, 0
    %s54 = sadd.s32 %s53, 1
    %s55 = scalar_select %p52, %s53, %s54
    %p58 = pneg %p52
    %p59 = scmp.eq.s32.totalorder %s8, 1
    %p60 = por %p58, %p59
    %p61 = scmp.ne.s32.totalorder %s53, %s56
    %p62 = scmp.eq.s32.totalorder %s8, 0
    %p63 = por %p61, %p62
    %p64 = scmp.ne.s32.totalorder %s53, %s56
    %p65 = scmp.eq.s32.totalorder %s13, 1
    %p66 = por %p64, %p65
    %p67 = scmp.ne.s32.totalorder %s56, %s57
    %p68 = scmp.eq.s32.totalorder %s13, 0
    %p69 = por %p67, %p68
    %p70 = scmp.ne.s32.totalorder %s56, %s57
    %p71 = scmp.eq.s32.totalorder %s14, 1
    %p72 = por %p70, %p71
    %p74 = scmp.ne.s32.totalorder %s57, %s73
    %p75 = scmp.eq.s32.totalorder %s14, 0
    %p76 = por %p74, %p75
    %s77 = ssub.s32 %s15, %s27
    %s78 = ssub.s32 %s16, %s23
    %s79 = sor.u32 %s77, %s78
    %p80 = scmp.eq.s32.totalorder %s79, 0
    %s82 = sadd.s32 %s81, 1
    %s83 = scalar_select %p80, %s81, %s82
    %p86 = pneg %p80
    %p87 = scmp.eq.s32.totalorder %s8, 1
    %p88 = por %p86, %p87
    %p89 = scmp.ne.s32.totalorder %s81, %s84
    %p90 = scmp.eq.s32.totalorder %s8, 0
    %p91 = por %p89, %p90
    %p92 = scmp.ne.s32.totalorder %s81, %s84
    %p93 = scmp.eq.s32.totalorder %s13, 1
    %p94 = por %p92, %p93
    %p95 = scmp.ne.s32.totalorder %s84, %s85
    %p96 = scmp.eq.s32.totalorder %s13, 0
    %p97 = por %p95, %p96
    %p98 = scmp.ne.s32.totalorder %s84, %s85
    %p99 = scmp.eq.s32.totalorder %s14, 1
    %p100 = por %p98, %p99
    %p102 = scmp.ne.s32.totalorder %s85, %s101
    %p103 = scmp.eq.s32.totalorder %s14, 0
    %p104 = por %p102, %p103
    %p105 = scmp.le.s32.totalorder 1, %s8
    %p106 = scmp.lt.s32.totalorder %s8, 3
    %p107 = pnand %p105, %p106
    %p108 = pneg %p107
    // Predicated region
    $region9: #{invertable_1x1_conv_forward.1} parent=5 // pred_check
      _
    $region10: #{invertable_1x1_conv_forward.1} parent=5 // pred_check_branch
      %110 = sbr.rel (%p107) target = $region12
    $region11: #{invertable_1x1_conv_forward.1} parent=5 // pred_region
      %s111 = ssub.s32 %s8, 1
      // Predicated region
      $region13: #{invertable_1x1_conv_forward.1} parent=11 // pred_check
        %p112 = pneg %p41
      $region14: #{invertable_1x1_conv_forward.1} parent=11 // pred_check_branch
        %114 = sbr.rel (%p112) target = $region16
      $region15: #{invertable_1x1_conv_forward.1} parent=11 // pred_region
        _
      $region16: #{invertable_1x1_conv_forward.1} parent=11 // pred_fallthru
        _
    $region12: #{invertable_1x1_conv_forward.1} parent=5 // pred_fallthru
      _
    %p115 = scmp.lt.s32.totalorder %s8, 2
    // Predicated region
    $region17: #{invertable_1x1_conv_forward.1} parent=5 // pred_check
      %p116 = pneg %p115
    $region18: #{invertable_1x1_conv_forward.1} parent=5 // pred_check_branch
      %118 = sbr.rel (%p116) target = $region20
    $region19: #{invertable_1x1_conv_forward.1} parent=5 // pred_region
      // Predicated region
      $region21: #{invertable_1x1_conv_forward.1} parent=19 // pred_check
        %p119 = pneg %p63
      $region22: #{invertable_1x1_conv_forward.1} parent=19 // pred_check_branch
        %121 = sbr.rel (%p119) target = $region24
      $region23: #{invertable_1x1_conv_forward.1} parent=19 // pred_region
        %s122 = smul.u32 2, %s16
        %p123 = scmp.lt.s32.totalorder %s15, 1
        %s124 = scalar_select %p123, %s15, 1
        %p125 = scmp.lt.s32.totalorder %s122, 1
        %s126 = scalar_select %p125, %s122, 1
        %s127 = smul.addr %s124, 2
        %s128 = sadd.s32 %s126, %s127
        %s129 = smul.addr %s128, 4
        %s130 = scalar_lea.vmem %s1, %s129
        %s131 = smul.u32 2, %s16
      $region24: #{invertable_1x1_conv_forward.1} parent=19 // pred_fallthru
        _
    $region20: #{invertable_1x1_conv_forward.1} parent=5 // pred_fallthru
      _
    %p132 = scmp.le.s32.totalorder 1, %s8
    %p133 = scmp.lt.s32.totalorder %s8, 3
    %p134 = pnand %p132, %p133
    %p135 = pneg %p134
    // Predicated region
    $region25: #{invertable_1x1_conv_forward.1} parent=5 // pred_check
      _
    $region26: #{invertable_1x1_conv_forward.1} parent=5 // pred_check_branch
      %137 = sbr.rel (%p134) target = $region28
    $region27: #{invertable_1x1_conv_forward.1} parent=5 // pred_region
      %s138 = ssub.s32 %s8, 1
      %p139 = pneg %p41
      %p140 = pneg %p38
      %s141 = smul.u32 2, %s18
      %p142 = scmp.lt.s32.totalorder %s17, 1
      %s143 = scalar_select %p142, %s17, 1
      %p144 = scmp.lt.s32.totalorder %s141, 1
      %s145 = scalar_select %p144, %s141, 1
      %s146 = smul.addr %s143, 2
      %s147 = sadd.s32 %s145, %s146
      %s148 = smul.addr %s147, 4
      %s149 = scalar_lea.vmem %s1, %s148
      %p150 = pneg %p69
      %p151 = pneg %p66
      %p152 = pneg %p97
      %p153 = pneg %p94
      %s154 = smul.u32 2, %s18
      %p155 = scmp.lt.s32.totalorder %s17, 1
      %s156 = scalar_select %p155, %s17, 1
      %p157 = scmp.lt.s32.totalorder %s154, 1
      %s158 = scalar_select %p157, %s154, 1
      %s159 = smul.addr %s156, 2
      %s160 = sadd.s32 %s158, %s159
      %s161 = smul.addr %s160, 4
      %s162 = scalar_lea.vmem %s2, %s161
      %s163 = smul.u32 2, %s18
      %p164 = scmp.lt.s32.totalorder %s17, 1
      %s165 = scalar_select %p164, %s17, 1
      %p166 = scmp.lt.s32.totalorder %s163, 1
      %s167 = scalar_select %p166, %s163, 1
      %s168 = smul.addr %s165, 2
      %s169 = sadd.s32 %s167, %s168
      %s170 = smul.addr %s169, 4
      %s171 = scalar_lea.vmem %s1, %s170
      %s172 = smul.u32 2, %s18
      %s173 = smul.u32 2, %s18
      %p174 = scmp.lt.s32.totalorder %s17, 1
      %s175 = scalar_select %p174, %s17, 1
      %p176 = scmp.lt.s32.totalorder %s173, 1
      %s177 = scalar_select %p176, %s173, 1
      %s178 = smul.addr %s175, 2
      %s179 = sadd.s32 %s177, %s178
      %s180 = smul.addr %s179, 4
      %s181 = scalar_lea.vmem %s2, %s180
      %s182 = smul.u32 2, %s18
      %v183 = vld [vmem:[%s0] sm:$0xf]
      %v184 = vld [vmem:[%s171] sm:$0xff]
      %v186 = vcombine.high %v184, %v184
      %vm187 = vcmask 31744
      %v189 = vsel %vm187, %v183, 0
      %vm191 = vcmask 1043456
      %v192 = vsel %vm191, %v184, 0
      %v194 = vsel %vm191, %v186, 0
      %196 = vmatprep.subr.mxu0 %v194
      %197 = vmatpush1.msra.mxu0 %v192
      %198 = vmatprep.subr.mxu0 0.0
      %199 = vmatpush1.msra.mxu0 0.0
      %200 = vmatprep.subr.mxu0 0.0
      %201 = vmatpush1.msra.mxu0 0.0
      %202 = vmatprep.subr.mxu0 0.0
      %203 = vmatpush1.msra.mxu0 0.0
      %204 = vmatprep.subr.mxu0 0.0
      %205 = vmatpush1.msra.mxu0 0.0
      %206 = vmatprep.subr.mxu0 0.0
      %207 = vmatpush1.msra.mxu0 0.0
      %208 = vmatprep.subr.mxu0 0.0
      %209 = vmatpush1.msra.mxu0 0.0
      %210 = vmatprep.subr.mxu0 0.0
      %211 = vmatpush1.msra.mxu0 0.0
      %212 = vmatprep.subr.mxu0 0.0
      %213 = vmatpush1.msra.mxu0 0.0
      %214 = vmatprep.subr.mxu0 0.0
      %215 = vmatpush1.msra.mxu0 0.0
      %216 = vmatprep.subr.mxu0 0.0
      %217 = vmatpush1.msra.mxu0 0.0
      %218 = vmatprep.subr.mxu0 0.0
      %219 = vmatpush1.msra.mxu0 0.0
      %220 = vmatprep.subr.mxu0 0.0
      %221 = vmatpush1.msra.mxu0 0.0
      %222 = vmatprep.subr.mxu0 0.0
      %223 = vmatpush1.msra.mxu0 0.0
      %224 = vmatprep.subr.mxu0 0.0
      %225 = vmatpush1.msra.mxu0 0.0
      %226 = vmatprep.subr.mxu0 0.0
      %227 = vmatpush1.msra.mxu0 0.0
      %228 = vmatprep.subr.mxu0 0.0
      %229 = vmatpush1.msra.mxu0 0.0
      %230 = vmatprep.subr.mxu0 0.0
      %231 = vmatpush1.msra.mxu0 0.0
      %232 = vmatprep.subr.mxu0 0.0
      %233 = vmatpush1.msra.mxu0 0.0
      %234 = vmatprep.subr.mxu0 0.0
      %235 = vmatpush1.msra.mxu0 0.0
      %236 = vmatprep.subr.mxu0 0.0
      %237 = vmatpush1.msra.mxu0 0.0
      %238 = vmatprep.subr.mxu0 0.0
      %239 = vmatpush1.msra.mxu0 0.0
      %240 = vmatprep.subr.mxu0 0.0
      %241 = vmatpush1.msra.mxu0 0.0
      %242 = vmatprep.subr.mxu0 0.0
      %243 = vmatpush1.msra.mxu0 0.0
      %244 = vmatprep.subr.mxu0 0.0
      %245 = vmatpush1.msra.mxu0 0.0
      %246 = vmatprep.subr.mxu0 0.0
      %247 = vmatpush1.msra.mxu0 0.0
      %248 = vmatprep.subr.mxu0 0.0
      %249 = vmatpush1.msra.mxu0 0.0
      %250 = vmatprep.subr.mxu0 0.0
      %251 = vmatpush1.msra.mxu0 0.0
      %252 = vmatprep.subr.mxu0 0.0
      %253 = vmatpush1.msra.mxu0 0.0
      %254 = vmatprep.subr.mxu0 0.0
      %255 = vmatpush1.msra.mxu0 0.0
      %256 = vmatprep.subr.mxu0 0.0
      %257 = vmatpush1.msra.mxu0 0.0
      %258 = vmatprep.subr.mxu0 0.0
      %259 = vmatpush1.msra.mxu0 0.0
      %260 = vmatprep.mubr.f32.mxu0 0.0
      %261 = vmatmul.mubr.f32.gmra.mrb[0].mxu0 %v189
      %v262 = vpop.f32.mrb[0].mxu0
      %v263 = vadd.f32 0.0, %v262
      %v264 = vpop.f32.mrb[0].mxu0
      %v265 = vadd.f32 0.0, %v264
      %266 = vdwg.mxu0
      %v269 = vcombine.low %v263, %v265
      %271 = vst [vmem:[%s181] sm:$0xff] %v269
      %s272 = smul.u32 2, %s18
      %p273 = scmp.lt.s32.totalorder %s17, 1
      %s274 = scalar_select %p273, %s17, 1
      %p275 = scmp.lt.s32.totalorder %s272, 1
      %s276 = scalar_select %p275, %s272, 1
      %s277 = smul.addr %s274, 2
      %s278 = sadd.s32 %s276, %s277
      %s279 = smul.addr %s278, 4
      %s280 = scalar_lea.vmem %s2, %s279
      // Predicated region
      $region29: #{invertable_1x1_conv_forward.1} parent=27 // pred_check
        %p281 = pneg %p94
      $region30: #{invertable_1x1_conv_forward.1} parent=27 // pred_check_branch
        %283 = sbr.rel (%p281) target = $region32
      $region31: #{invertable_1x1_conv_forward.1} parent=27 // pred_region
        %s284 = smul.u32 2, %s18
      $region32: #{invertable_1x1_conv_forward.1} parent=27 // pred_fallthru
        _
    $region28: #{invertable_1x1_conv_forward.1} parent=5 // pred_fallthru
      _
    %p285 = scmp.le.s32.totalorder 2, %s8
    // Predicated region
    $region33: #{invertable_1x1_conv_forward.1} parent=5 // pred_check
      %p286 = pneg %p285
    $region34: #{invertable_1x1_conv_forward.1} parent=5 // pred_check_branch
      %288 = sbr.rel (%p286) target = $region36
    $region35: #{invertable_1x1_conv_forward.1} parent=5 // pred_region
      %s289 = ssub.s32 %s8, 2
      // Predicated region
      $region37: #{invertable_1x1_conv_forward.1} parent=35 // pred_check
        %p290 = pneg %p100
      $region38: #{invertable_1x1_conv_forward.1} parent=35 // pred_check_branch
        %292 = sbr.rel (%p290) target = $region40
      $region39: #{invertable_1x1_conv_forward.1} parent=35 // pred_region
        %s293 = smul.u32 2, %s20
        %p294 = scmp.lt.s32.totalorder %s19, 1
        %s295 = scalar_select %p294, %s19, 1
        %p296 = scmp.lt.s32.totalorder %s293, 1
        %s297 = scalar_select %p296, %s293, 1
        %s298 = smul.addr %s295, 2
        %s299 = sadd.s32 %s297, %s298
        %s300 = smul.addr %s299, 4
        %s301 = scalar_lea.vmem %s2, %s300
      $region40: #{invertable_1x1_conv_forward.1} parent=35 // pred_fallthru
        _
    $region36: #{invertable_1x1_conv_forward.1} parent=5 // pred_fallthru
      _
  $region6: #{invertable_1x1_conv_forward.1} parent=0 // loop_footer
    %s12 = sadd.s32 1, %s8
  $region7: #{invertable_1x1_conv_forward.1} parent=0 // loop_footer_branch
    %7 = sbr.rel target = $region3
  $region8: #{invertable_1x1_conv_forward.1} parent=0 // loop_exit
    _

</llo_original>
